<compile_context>
chip_gen: v6e
topology: v6e:2x2x1
jax: 0.10.0
libtpu: 0.0.40
codegen_flags: <defaults>
</compile_context>

<pallas_src>
import functools

import numpy as np
import jax
import jax.numpy as jnp
from jax.experimental import pallas as pl
from jax.experimental.pallas import tpu as pltpu


def _gaussian_hist_kernel(params_ref, x_ref, y_ref, o_ref, *, bins):
    # params_ref (SMEM, (4,) f32): [vmin, delta, inv_two_sigma_sq, scale]
    vmin = params_ref[0]
    delta = params_ref[1]
    inv_two_sigma_sq = params_ref[2]
    scale = params_ref[3]

    # centers[j] = vmin + delta * (j + 0.5) along the lane axis: (1, bins).
    idx = jax.lax.broadcasted_iota(jnp.int32, (1, bins), 1).astype(jnp.float32)
    centers = vmin + delta * (idx + 0.5)                 # (1, bins)

    # Column 0 of the (M, 100) inputs == every 100th sample (the ::100 stride).
    x_col = x_ref[:, 0:1]                                # (M, 1)
    y_col = y_ref[:, 0:1]                                # (M, 1)

    dx = x_col - centers                                 # (M, bins), bins on lanes
    dy = y_col - centers                                 # (M, bins)
    gx = jnp.exp(-(dx * dx) * inv_two_sigma_sq)          # EUP
    gy = jnp.exp(-(dy * dy) * inv_two_sigma_sq)          # EUP

    # hist[i, j] = sum_m gx[m, i] * gy[m, j]  -> contract dim 0 of both
    # (gx^T @ gy); RHS is already (K, N) for the MXU weight push.
    hist = jax.lax.dot_general(
        gx, gy, (((0,), (0,)), ((), ())),
        preferred_element_type=jnp.float32)
    o_ref[...] = hist * scale


@functools.partial(jax.jit, static_argnames=("bins",))
def gaussian_histogram(x, y, *, bins, vmin, vmax, sigma):
    """Pallas implementation of GaussianHistogram.forward(x, y)."""
    x = x.astype(jnp.float32)
    y = y.astype(jnp.float32)

    n = x.shape[0]
    m = -(-n // 100)                 # = number of samples taken by x[::100]
    pad = m * 100 - n
    if pad:                          # padding never lands in column 0
        x = jnp.pad(x, (0, pad))
        y = jnp.pad(y, (0, pad))
    x2 = x.reshape(m, 100)           # metadata-only reshape for contiguous x
    y2 = y.reshape(m, 100)

    # Runtime scalars -> SMEM; vmin/vmax/sigma are traced, so new values
    # do not retrace/recompile.
    vmin_f = jnp.asarray(vmin, jnp.float32)
    vmax_f = jnp.asarray(vmax, jnp.float32)
    sigma_f = jnp.asarray(sigma, jnp.float32)
    delta = (vmax_f - vmin_f) / jnp.float32(bins)
    inv_two_sigma_sq = 0.5 / (sigma_f * sigma_f)
    scale = delta * 100.0 / (2.0 * np.pi * sigma_f * sigma_f)
    params = jnp.stack([vmin_f, delta, inv_two_sigma_sq, scale]).astype(jnp.float32)

    kernel = functools.partial(_gaussian_hist_kernel, bins=bins)

    # No grid: single invocation, whole arrays resident in SMEM/VMEM.
    return pl.pallas_call(
        kernel,
        out_shape=jax.ShapeDtypeStruct((bins, bins), jnp.float32),
        in_specs=[
            pl.BlockSpec(memory_space=pltpu.MemorySpace.SMEM),
            pl.BlockSpec(memory_space=pltpu.MemorySpace.VMEM),
            pl.BlockSpec(memory_space=pltpu.MemorySpace.VMEM),
        ],
        out_specs=pl.BlockSpec(memory_space=pltpu.MemorySpace.VMEM),
    )(params, x2, y2)


def _reference(x, y, *, bins, vmin, vmax, sigma):
    """Pure-JAX mirror of the PyTorch forward (for verification)."""
    delta = float(vmax - vmin) / float(bins)
    centers = float(vmin) + delta * (jnp.arange(bins, dtype=jnp.float32) + 0.5)
    dx = (x[None, :] - centers[:, None])[:, ::100]
    dy = (y[None, :] - centers[:, None])[:, ::100]
    xy = dx[:, None, :] ** 2 + dy[None, :, :] ** 2
    hist = jnp.exp(-0.5 * xy / sigma ** 2) / (sigma ** 2 * np.pi * 2) * delta
    hist = hist.sum(axis=-1)
    return hist * 100.0


if __name__ == "__main__":
    BINS, VMIN, VMAX, SIGMA = 32, 0.0, 1.0, 0.1
    N = 1600  # -> M = 16 samples after the ::100 stride

    key = jax.random.PRNGKey(0)
    kx, ky = jax.random.split(key)
    x = jax.random.uniform(kx, (N,), dtype=jnp.float32, minval=VMIN, maxval=VMAX)
    y = jax.random.uniform(ky, (N,), dtype=jnp.float32, minval=VMIN, maxval=VMAX)

    out = gaussian_histogram(x, y, bins=BINS, vmin=VMIN, vmax=VMAX, sigma=SIGMA)
    out = jax.block_until_ready(out)

    ref = _reference(x, y, bins=BINS, vmin=VMIN, vmax=VMAX, sigma=SIGMA)
    np.testing.assert_allclose(np.asarray(out), np.asarray(ref),
                               rtol=1e-5, atol=1e-5)

    assert out.shape == (BINS, BINS) and out.dtype == jnp.float32
    print("KERNEL_OK")
</pallas_src>

<mosaic_0001>
module attributes {stable_mosaic.version = 11 : i64} {
  func.func @_gaussian_hist_kernel(%arg0: memref<4xf32, #tpu.memory_space<smem>>, %arg1: memref<16x100xf32, #tpu.memory_space<vmem>>, %arg2: memref<16x100xf32, #tpu.memory_space<vmem>>, %arg3: memref<32x32xf32, #tpu.memory_space<vmem>>) attributes {dimension_semantics = [], scalar_prefetch = 0 : i64, scratch_operands = 0 : i64, tpu.core_type = #tpu.core_type<tc>} {
    %c0 = arith.constant 0 : index
    %0 = memref.load %arg0[%c0] : memref<4xf32, #tpu.memory_space<smem>>
    %c1 = arith.constant 1 : index
    %1 = memref.load %arg0[%c1] : memref<4xf32, #tpu.memory_space<smem>>
    %c2 = arith.constant 2 : index
    %2 = memref.load %arg0[%c2] : memref<4xf32, #tpu.memory_space<smem>>
    %c3 = arith.constant 3 : index
    %3 = memref.load %arg0[%c3] : memref<4xf32, #tpu.memory_space<smem>>
    %4 = tpu.iota {dimensions = array<i32: 1>} : vector<1x32xi32>
    %5 = arith.sitofp %4 : vector<1x32xi32> to vector<1x32xf32>
    %cst = arith.constant 5.000000e-01 : f32
    %6 = vector.broadcast %cst : f32 to vector<1x32xf32>
    %7 = arith.addf %5, %6 : vector<1x32xf32>
    %8 = vector.broadcast %1 : f32 to vector<1x32xf32>
    %9 = arith.mulf %8, %7 : vector<1x32xf32>
    %10 = vector.broadcast %0 : f32 to vector<1x32xf32>
    %11 = arith.addf %10, %9 : vector<1x32xf32>
    %c0_0 = arith.constant 0 : index
    %c0_1 = arith.constant 0 : index
    %12 = vector.load %arg1[%c0_0, %c0_1] : memref<16x100xf32, #tpu.memory_space<vmem>>, vector<16x1xf32>
    %c0_2 = arith.constant 0 : index
    %c0_3 = arith.constant 0 : index
    %13 = vector.load %arg2[%c0_2, %c0_3] : memref<16x100xf32, #tpu.memory_space<vmem>>, vector<16x1xf32>
    %14 = vector.broadcast %12 : vector<16x1xf32> to vector<16x32xf32>
    %15 = vector.broadcast %11 : vector<1x32xf32> to vector<16x32xf32>
    %16 = arith.subf %14, %15 : vector<16x32xf32>
    %17 = vector.broadcast %13 : vector<16x1xf32> to vector<16x32xf32>
    %18 = vector.broadcast %11 : vector<1x32xf32> to vector<16x32xf32>
    %19 = arith.subf %17, %18 : vector<16x32xf32>
    %20 = arith.mulf %16, %16 : vector<16x32xf32>
    %cst_4 = arith.constant 0.000000e+00 : f32
    %21 = vector.broadcast %cst_4 : f32 to vector<16x32xf32>
    %22 = arith.subf %21, %20 : vector<16x32xf32>
    %23 = vector.broadcast %2 : f32 to vector<16x32xf32>
    %24 = arith.mulf %22, %23 : vector<16x32xf32>
    %25 = math.exp %24 : vector<16x32xf32>
    %26 = arith.mulf %19, %19 : vector<16x32xf32>
    %cst_5 = arith.constant 0.000000e+00 : f32
    %27 = vector.broadcast %cst_5 : f32 to vector<16x32xf32>
    %28 = arith.subf %27, %26 : vector<16x32xf32>
    %29 = vector.broadcast %2 : f32 to vector<16x32xf32>
    %30 = arith.mulf %28, %29 : vector<16x32xf32>
    %31 = math.exp %30 : vector<16x32xf32>
    %cst_6 = arith.constant dense<0.000000e+00> : vector<32x32xf32>
    %32 = tpu.matmul %25, %31, %cst_6 {dimension_numbers = #tpu.dot_dimension_numbers<[0], [0], [1], [1], [0, 1, 1, 1], [], []>} : vector<16x32xf32>, vector<16x32xf32>, vector<32x32xf32> -> vector<32x32xf32>
    %33 = vector.broadcast %3 : f32 to vector<32x32xf32>
    %34 = arith.mulf %32, %33 : vector<32x32xf32>
    %c0_7 = arith.constant 0 : index
    %c0_8 = arith.constant 0 : index
    %35 = vector.load %arg3[%c0_7, %c0_8] : memref<32x32xf32, #tpu.memory_space<vmem>>, vector<32x32xf32>
    tpu.vector_store %arg3[%c0_7, %c0_8], %34 {strides = array<i32>} : memref<32x32xf32, #tpu.memory_space<vmem>>, vector<32x32xf32>,
    return
  }
}

</mosaic_0001>

<llo_original>
// kernel: gaussian_histogram.1
$region0: #{gaussian_histogram.1}
  #allocation0 [shape = 'u32[]', space=smem, size = 0x4, offset = 0x4, fixed_abs, tag = 'smem constant byte address 0x4 - core index']
  #allocation1 [shape = 'u32[144,128]{1,0:T(1,128)}', space=vmem, size = 0x12000, scoped, tag = 'internal scratch']
  %s0 = inlined_call_operand.vmem [shape: f32[4], index: 0, kind: input, shape index: {}]
  %s1 = inlined_call_operand.vmem [shape: f32[16,100], index: 1, kind: input, shape index: {}]
  %s2 = inlined_call_operand.vmem [shape: f32[16,100], index: 2, kind: input, shape index: {}]
  %s3 = inlined_call_operand.hbm [shape: f32[32,32], index: 3, kind: output, shape index: {}]
  %s4 = sld [smem:[#allocation0]]
  $region26: #{gaussian_histogram.1} parent=0
    _
  %s6 = ssub.s32 1, %s4
  %s7 = scalar_select 0, %s6, %s4
  $region1: #{gaussian_histogram.1} parent=0
    #allocation2 [shape = 'u8[512]{0}', space=smem, size = 0x200, scoped, tag = 'input window, operand 0, single buffered']
    #allocation3 [shape = 's32[1]{0}', space=sflag, size = 0x4, scoped, tag = 'scoped memory for gaussian_histogram.1']
    #allocation4 [shape = 's32[1]{0}', space=sflag, size = 0x4, scoped, tag = 'scoped memory for gaussian_histogram.1']
    #allocation5 [shape = 'u8[16384]{0}', space=vmem, size = 0x4000, scoped, tag = 'output window, operand 0, single buffered']
    %8 = vsyncpa [#allocation4], 0
    %9 = vsyncpa [#allocation3], 0
    // Predicated region
    $region2: #{gaussian_histogram.1} parent=1 // pred_check
      _
    $region3: #{gaussian_histogram.1} parent=1 // pred_check_branch
      %11 = sbr.rel (0) target = $region5
    $region4: #{gaussian_histogram.1} parent=1 // pred_region
      %s13 = ssub.s32 16, 16
      %14 = vsyncadd [#allocation4], %s13
      %s16 = sshll.u32 %s0, 4
      %s17 = int_to_ptr.vmem [resolvable:$true] %s16
      %19 = dma.vmem_to_smem %s17, 16, [#allocation2], [#allocation4]
    $region5: #{gaussian_histogram.1} parent=1 // pred_fallthru
      _
    // Predicated region
    $region6: #{gaussian_histogram.1} parent=1 // pred_check
      _
    $region7: #{gaussian_histogram.1} parent=1 // pred_check_branch
      %21 = sbr.rel (0) target = $region9
    $region8: #{gaussian_histogram.1} parent=1 // pred_region
      _
    $region9: #{gaussian_histogram.1} parent=1 // pred_fallthru
      _
    // Predicated region
    $region10: #{gaussian_histogram.1} parent=1 // pred_check
      _
    $region11: #{gaussian_histogram.1} parent=1 // pred_check_branch
      %23 = sbr.rel (0) target = $region13
    $region12: #{gaussian_histogram.1} parent=1 // pred_region
      _
    $region13: #{gaussian_histogram.1} parent=1 // pred_fallthru
      _
    // Predicated region
    $region14: #{gaussian_histogram.1} parent=1 // pred_check
      _
    $region15: #{gaussian_histogram.1} parent=1 // pred_check_branch
      %25 = sbr.rel (0) target = $region17
    $region16: #{gaussian_histogram.1} parent=1 // pred_region
      %26 = dma.done [#allocation4], 16
    $region17: #{gaussian_histogram.1} parent=1 // pred_fallthru
      _
    %27 = sfence
    %s28 = sld [smem:[#allocation2]]
    %s29 = sld [smem:[#allocation2 + $0x1]]
    %s30 = sld [smem:[#allocation2 + $0x2]]
    %s31 = sld [smem:[#allocation2 + $0x3]]
    %v32 = vlaneseq
    %v33 = vand.u32 %v32, 127
    %v34 = vcvt.s32.f32 %v33
    %v35 = vadd.f32 %v34, 0.5
    %v36 = vstv %s29
    %v37 = vmul.f32 %v36, %v35
    %v38 = vstv %s28
    %v39 = vadd.f32 %v38, %v37
    %v40 = vld [vmem:[%s1] sm:$0xff]
    %v41 = vld [vmem:[%s1 + $0x8] sm:$0xff]
    %v42 = vld [vmem:[%s2] sm:$0xff]
    %v43 = vld [vmem:[%s2 + $0x8] sm:$0xff]
    %45 = vset.pattern.permute.xlu0 0
    %46 = vperm.xlu0 %45, %v40
    %v47 = vpop.permute.xlu0 %46
    %50 = vset.pattern.permute.xlu0 0
    %51 = vperm.xlu0 %50, %v41
    %v52 = vpop.permute.xlu0 %51
    %v54 = vsub.f32 %v47, %v39
    %v55 = vsub.f32 %v52, %v39
    %57 = vset.pattern.permute.xlu0 0
    %58 = vperm.xlu0 %57, %v42
    %v59 = vpop.permute.xlu0 %58
    %62 = vset.pattern.permute.xlu0 0
    %63 = vperm.xlu0 %62, %v43
    %v64 = vpop.permute.xlu0 %63
    %v66 = vsub.f32 %v59, %v39
    %v67 = vsub.f32 %v64, %v39
    %v68 = vmul.f32 %v54, %v54
    %v69 = vmul.f32 %v55, %v55
    %v70 = vsub.f32 0.0, %v68
    %v71 = vsub.f32 0.0, %v69
    %v72 = vstv %s30
    %v73 = vmul.f32 %v70, %v72
    %v74 = vmul.f32 %v71, %v72
    %v75 = vmul.f32 %v73, 1.442695
    %v76 = vpow.pop %v75
    %v77 = vmul.f32 %v74, 1.442695
    %v78 = vpow.pop %v77
    %v79 = vmul.f32 %v66, %v66
    %v80 = vmul.f32 %v67, %v67
    %v81 = vsub.f32 0.0, %v79
    %v82 = vsub.f32 0.0, %v80
    %v83 = vmul.f32 %v81, %v72
    %v84 = vmul.f32 %v82, %v72
    %v85 = vmul.f32 %v83, 1.442695
    %v86 = vpow.pop %v85
    %v87 = vmul.f32 %v84, 1.442695
    %v88 = vpow.pop %v87
    %89 = vxpose.xlu0.b32.start [1/16] %v76, 128
    %90 = vxpose.xlu0.b32.cont [2/16] %v78, 128
    %91 = vxpose.xlu0.b32.cont [3/16] 0.0, 128
    %92 = vxpose.xlu0.b32.cont [4/16] 0.0, 128
    %93 = vxpose.xlu0.b32.cont [5/16] 0.0, 128
    %94 = vxpose.xlu0.b32.cont [6/16] 0.0, 128
    %95 = vxpose.xlu0.b32.cont [7/16] 0.0, 128
    %96 = vxpose.xlu0.b32.cont [8/16] 0.0, 128
    %97 = vxpose.xlu0.b32.cont [9/16] 0.0, 128
    %98 = vxpose.xlu0.b32.cont [10/16] 0.0, 128
    %99 = vxpose.xlu0.b32.cont [11/16] 0.0, 128
    %100 = vxpose.xlu0.b32.cont [12/16] 0.0, 128
    %101 = vxpose.xlu0.b32.cont [13/16] 0.0, 128
    %102 = vxpose.xlu0.b32.cont [14/16] 0.0, 128
    %103 = vxpose.xlu0.b32.cont [15/16] 0.0, 128
    %104 = vxpose.xlu0.b32.end [16/16] 0.0, 128
    %v105 = vpop.trf.xlu0
    %v106 = vpop.trf.xlu0
    %v107 = vpop.trf.xlu0
    %v108 = vpop.trf.xlu0
    %v109 = vpop.trf.xlu0
    %v110 = vpop.trf.xlu0
    %v111 = vpop.trf.xlu0
    %v112 = vpop.trf.xlu0
    %v113 = vpop.trf.xlu0
    %v114 = vpop.trf.xlu0
    %v115 = vpop.trf.xlu0
    %v116 = vpop.trf.xlu0
    %v117 = vpop.trf.xlu0
    %v118 = vpop.trf.xlu0
    %v119 = vpop.trf.xlu0
    %v120 = vpop.trf.xlu0
    %vm121 = vcmask 130048
    %v123 = vsel %vm121, %v105, 0
    %v126 = vsel %vm121, %v106, 0
    %v129 = vsel %vm121, %v107, 0
    %v132 = vsel %vm121, %v108, 0
    %134 = vmatprep.subr.mxu0 0.0
    %135 = vmatpush1.msra.mxu0 0.0
    %136 = vmatprep.subr.mxu0 0.0
    %137 = vmatpush1.msra.mxu0 0.0
    %138 = vmatprep.subr.mxu0 0.0
    %139 = vmatpush1.msra.mxu0 0.0
    %140 = vmatprep.subr.mxu0 0.0
    %141 = vmatpush1.msra.mxu0 0.0
    %142 = vmatprep.subr.mxu0 0.0
    %143 = vmatpush1.msra.mxu0 0.0
    %144 = vmatprep.subr.mxu0 0.0
    %145 = vmatpush1.msra.mxu0 0.0
    %146 = vmatprep.subr.mxu0 0.0
    %147 = vmatpush1.msra.mxu0 0.0
    %148 = vmatprep.subr.mxu0 0.0
    %149 = vmatpush1.msra.mxu0 0.0
    %150 = vmatprep.subr.mxu0 0.0
    %151 = vmatpush1.msra.mxu0 0.0
    %152 = vmatprep.subr.mxu0 0.0
    %153 = vmatpush1.msra.mxu0 0.0
    %154 = vmatprep.subr.mxu0 0.0
    %155 = vmatpush1.msra.mxu0 0.0
    %156 = vmatprep.subr.mxu0 0.0
    %157 = vmatpush1.msra.mxu0 0.0
    %158 = vmatprep.subr.mxu0 0.0
    %159 = vmatpush1.msra.mxu0 0.0
    %160 = vmatprep.subr.mxu0 0.0
    %161 = vmatpush1.msra.mxu0 0.0
    %162 = vmatprep.subr.mxu0 0.0
    %163 = vmatpush1.msra.mxu0 %v88
    %164 = vmatprep.subr.mxu0 0.0
    %165 = vmatpush1.msra.mxu0 %v86
    %166 = vmatprep.subr.mxu0 0.0
    %167 = vmatpush2.msra.mxu0 0.0
    %168 = vmatprep.subr.mxu0 0.0
    %169 = vmatpush2.msra.mxu0 0.0
    %170 = vmatprep.subr.mxu0 0.0
    %171 = vmatpush2.msra.mxu0 0.0
    %172 = vmatprep.subr.mxu0 0.0
    %173 = vmatpush2.msra.mxu0 0.0
    %174 = vmatprep.subr.mxu0 0.0
    %175 = vmatpush2.msra.mxu0 0.0
    %176 = vmatprep.subr.mxu0 0.0
    %177 = vmatpush2.msra.mxu0 0.0
    %178 = vmatprep.subr.mxu0 0.0
    %179 = vmatpush2.msra.mxu0 0.0
    %180 = vmatprep.subr.mxu0 0.0
    %181 = vmatpush2.msra.mxu0 0.0
    %182 = vmatprep.subr.mxu0 0.0
    %183 = vmatpush2.msra.mxu0 0.0
    %184 = vmatprep.subr.mxu0 0.0
    %185 = vmatpush2.msra.mxu0 0.0
    %186 = vmatprep.subr.mxu0 0.0
    %187 = vmatpush2.msra.mxu0 0.0
    %188 = vmatprep.subr.mxu0 0.0
    %189 = vmatpush2.msra.mxu0 0.0
    %190 = vmatprep.subr.mxu0 0.0
    %191 = vmatpush2.msra.mxu0 0.0
    %192 = vmatprep.subr.mxu0 0.0
    %193 = vmatpush2.msra.mxu0 0.0
    %194 = vmatprep.subr.mxu0 0.0
    %195 = vmatpush2.msra.mxu0 0.0
    %196 = vmatprep.subr.mxu0 0.0
    %197 = vmatpush2.msra.mxu0 0.0
    %198 = vmatprep.mubr.f32.mxu0 0.0
    %199 = vmatmul.mubr.f32.gmra.mxu0 %v123
    %v200 = vpop.f32.mrf.mxu0
    %v201 = vadd.f32 0.0, %v200
    %v202 = vpop.f32.mrf.mxu0
    %203 = vmatprep.mubr.f32.mxu0 0.0
    %204 = vmatmul.mubr.f32.gmra.mxu0 %v126
    %v205 = vpop.f32.mrf.mxu0
    %v206 = vadd.f32 0.0, %v205
    %v207 = vpop.f32.mrf.mxu0
    %208 = vmatprep.mubr.f32.mxu0 0.0
    %209 = vmatmul.mubr.f32.gmra.mxu0 %v129
    %v210 = vpop.f32.mrf.mxu0
    %v211 = vadd.f32 0.0, %v210
    %v212 = vpop.f32.mrf.mxu0
    %213 = vmatprep.mubr.f32.mxu0 0.0
    %214 = vmatmul.mubr.f32.gmra.mxu0 %v132
    %v215 = vpop.f32.mrf.mxu0
    %v216 = vadd.f32 0.0, %v215
    %v217 = vpop.f32.mrf.mxu0
    %218 = vdwg.mxu0
    %v219 = vstv %s31
    %v220 = vmul.f32 %v201, %v219
    %v221 = vmul.f32 %v206, %v219
    %v222 = vmul.f32 %v211, %v219
    %v223 = vmul.f32 %v216, %v219
    %vm224 = vcmask 261120
    %225 = vst.msk [vmem:[#allocation5] sm:$0xff] %vm224, %v220
    %226 = vst.msk [vmem:[#allocation5 + $0x8] sm:$0xff] %vm224, %v221
    %227 = vst.msk [vmem:[#allocation5 + $0x10] sm:$0xff] %vm224, %v222
    %228 = vst.msk [vmem:[#allocation5 + $0x18] sm:$0xff] %vm224, %v223
    // Predicated region
    $region18: #{gaussian_histogram.1} parent=1 // pred_check
      _
    $region19: #{gaussian_histogram.1} parent=1 // pred_check_branch
      %230 = sbr.rel (0) target = $region21
    $region20: #{gaussian_histogram.1} parent=1 // pred_region
      %s232 = ssub.s32 512, 512
      %233 = vsyncadd [#allocation3], %s232
      %s234 = sshll.u32 [#allocation5], 4
      %s235 = int_to_ptr.vmem [resolvable:$true] %s234
      %240 = dma.vmem_to_hbm [thread:$0]  %s235, 512, %s3, [#allocation3], 128, 128, 8
    $region21: #{gaussian_histogram.1} parent=1 // pred_fallthru
      _
    // Predicated region
    $region22: #{gaussian_histogram.1} parent=1 // pred_check
      _
    $region23: #{gaussian_histogram.1} parent=1 // pred_check_branch
      %242 = sbr.rel (0) target = $region25
    $region24: #{gaussian_histogram.1} parent=1 // pred_region
      %243 = dma.done [#allocation3], 512
    $region25: #{gaussian_histogram.1} parent=1 // pred_fallthru
      _
    %244 = vsyncpa [#allocation3], 1
    %245 = vsyncpa [#allocation4], 1

</llo_original>
